<compile_context>
chip_gen: v6e
topology: v6e:2x2x1
jax: 0.10.0
libtpu: 0.0.40
codegen_flags: <defaults>
</compile_context>

<pallas_src>
import math

import jax
import jax.numpy as jnp
from jax.experimental import pallas as pl
from jax.experimental.pallas import tpu as pltpu


def _add_pe_kernel(x_ref, pe_ref, o_ref):
    # x_ref / o_ref / pe_ref: (1, tS, D) blocks, all in the activation dtype.
    # Pure vreg-aligned elementwise add; PE block index is constant across the
    # batch sweep so its DMA is skipped after the first batch step of a tile.
    o_ref[...] = x_ref[...] + pe_ref[...]


def _sinusoidal_table(S: int, D: int, dtype) -> jax.Array:
    """(1, S, D) interleaved sin/cos table, computed once in the wrapper."""
    channels = int(math.ceil(D / 2) * 2)
    inv_freq = 1.0 / (
        10000.0 ** (jnp.arange(0, channels, 2, dtype=jnp.float32) / channels)
    )
    pos = jnp.arange(S, dtype=jnp.float32)
    sin_inp = pos[:, None] * inv_freq[None, :]                    # (S, channels//2)
    emb = jnp.stack((jnp.sin(sin_inp), jnp.cos(sin_inp)), axis=-1)
    emb = emb.reshape(S, channels)[:, :D]
    return emb.astype(dtype)[None, :, :]                           # (1, S, D)


def _pick_seq_tile(S: int, D: int, itemsize: int):
    """Pick a multiple-of-8 row tile and a matching scoped-VMEM limit."""
    if S <= 8:
        tS = S  # block dim equal to full extent is always legal
    else:
        try:
            vmem_cap = int(pltpu.get_tpu_info().vmem_capacity_bytes)
        except Exception:
            vmem_cap = 64 * 1024 * 1024  # assume the smallest (v7x per-TC)
        # 3 streams (x, pe, out), each double-buffered -> ~6 live tiles.
        target_tile_bytes = (12 << 20) if vmem_cap >= (100 << 20) else (4 << 20)
        rows = max(8, target_tile_bytes // max(1, D * itemsize))
        rows = (rows // 8) * 8
        # Keep >= 2 sequence tiles when S allows it (v7x has 2 TensorCores).
        rows = min(rows, 8 * pl.cdiv(S, 16))
        tS = max(8, rows)
    tile_bytes = tS * D * itemsize
    vmem_limit = 6 * tile_bytes + (4 << 20)        # tiles + compiler scratch margin
    vmem_limit = max(vmem_limit, 16 << 20)
    return tS, int(vmem_limit)


def sinusoidal_pos_encoding(seq: jax.Array) -> jax.Array:
    """seq: (B, S, D) -> (B, S, D) with interleaved sinusoidal PE added.

    NOTE: for best store throughput D should be a multiple of 128 (typical
    transformer widths already are); small D here is only for the smoke test.
    """
    B, S, D = seq.shape
    tS, vmem_limit = _pick_seq_tile(S, D, seq.dtype.itemsize)
    n_seq_tiles = pl.cdiv(S, tS)

    pe = _sinusoidal_table(S, D, seq.dtype)  # (1, S, D), constant w.r.t. seq

    return pl.pallas_call(
        _add_pe_kernel,
        out_shape=jax.ShapeDtypeStruct((B, S, D), seq.dtype),
        # seq tile is the OUTER axis so the PE block index stays constant across
        # the full batch sweep (its DMA is elided on repeated block indices).
        grid=(n_seq_tiles, B),
        in_specs=[
            pl.BlockSpec((1, tS, D), lambda s, b: (b, s, 0)),   # activations
            pl.BlockSpec((1, tS, D), lambda s, b: (0, s, 0)),   # PE table
        ],
        out_specs=pl.BlockSpec((1, tS, D), lambda s, b: (b, s, 0)),
        compiler_params=pltpu.CompilerParams(
            dimension_semantics=("parallel", "parallel"),
            vmem_limit_bytes=vmem_limit,
        ),
    )(seq, pe)


def _reference(seq: jax.Array) -> jax.Array:
    """Pure-JAX reference mirroring positional_encodings' PositionalEncoding1D + Summer."""
    B, S, D = seq.shape
    channels = int(math.ceil(D / 2) * 2)
    inv_freq = 1.0 / (
        10000.0 ** (jnp.arange(0, channels, 2, dtype=jnp.float32) / channels)
    )
    pos = jnp.arange(S, dtype=jnp.float32)
    sin_inp = jnp.einsum("i,j->ij", pos, inv_freq)
    emb = jnp.stack((jnp.sin(sin_inp), jnp.cos(sin_inp)), axis=-1).reshape(S, channels)
    pe = emb[:, :D]
    return seq + pe[None, :, :].astype(seq.dtype)


if __name__ == "__main__":
    key = jax.random.PRNGKey(0)
    B, S, D = 2, 8, 32
    seq = jax.random.normal(key, (B, S, D), dtype=jnp.float32)

    ref = _reference(seq)

    out = sinusoidal_pos_encoding(seq)
    out = jax.block_until_ready(out)

    assert out.shape == (B, S, D)
    assert jnp.allclose(out, ref, atol=1e-4, rtol=1e-4), "mismatch vs reference"

    print("KERNEL_OK")
</pallas_src>

<mosaic_0001>
module attributes {stable_mosaic.version = 11 : i64} {
  func.func @_add_pe_kernel(%arg0: i32, %arg1: i32, %arg2: memref<1x8x32xf32, #tpu.memory_space<vmem>>, %arg3: memref<1x8x32xf32, #tpu.memory_space<vmem>>, %arg4: memref<1x8x32xf32, #tpu.memory_space<vmem>>) attributes {dimension_semantics = [#tpu.dimension_semantics<parallel>, #tpu.dimension_semantics<parallel>], iteration_bounds = array<i64: 1, 2>, scalar_prefetch = 0 : i64, scratch_operands = 0 : i64, tpu.core_type = #tpu.core_type<tc>, window_params = [{transform_indices = @transform_0, window_bounds = array<i64: 1, 8, 32>}, {transform_indices = @transform_1, window_bounds = array<i64: 1, 8, 32>}, {transform_indices = @transform_2, window_bounds = array<i64: 1, 8, 32>}]} {
    %c0 = arith.constant 0 : index
    %c0_0 = arith.constant 0 : index
    %c0_1 = arith.constant 0 : index
    %0 = vector.load %arg2[%c0, %c0_0, %c0_1] : memref<1x8x32xf32, #tpu.memory_space<vmem>>, vector<1x8x32xf32>
    %c0_2 = arith.constant 0 : index
    %c0_3 = arith.constant 0 : index
    %c0_4 = arith.constant 0 : index
    %1 = vector.load %arg3[%c0_2, %c0_3, %c0_4] : memref<1x8x32xf32, #tpu.memory_space<vmem>>, vector<1x8x32xf32>
    %2 = arith.addf %0, %1 : vector<1x8x32xf32>
    %c0_5 = arith.constant 0 : index
    %c0_6 = arith.constant 0 : index
    %c0_7 = arith.constant 0 : index
    %3 = vector.load %arg4[%c0_5, %c0_6, %c0_7] : memref<1x8x32xf32, #tpu.memory_space<vmem>>, vector<1x8x32xf32>
    tpu.vector_store %arg4[%c0_5, %c0_6, %c0_7], %2 {strides = array<i32>} : memref<1x8x32xf32, #tpu.memory_space<vmem>>, vector<1x8x32xf32>,
    return
  }
  func.func @transform_0(%arg0: i32, %arg1: i32) -> (i32, i32, i32) {
    %c0_i32 = arith.constant 0 : i32
    %c0_i32_0 = arith.constant 0 : i32
    return %arg1, %arg0, %c0_i32 : i32, i32, i32
  }
  func.func @transform_1(%arg0: i32, %arg1: i32) -> (i32, i32, i32) {
    %c0_i32 = arith.constant 0 : i32
    %c0_i32_0 = arith.constant 0 : i32
    %c0_i32_1 = arith.constant 0 : i32
    return %c0_i32, %arg0, %c0_i32_0 : i32, i32, i32
  }
  func.func @transform_2(%arg0: i32, %arg1: i32) -> (i32, i32, i32) {
    %c0_i32 = arith.constant 0 : i32
    %c0_i32_0 = arith.constant 0 : i32
    return %arg1, %arg0, %c0_i32 : i32, i32, i32
  }
}

</mosaic_0001>

<llo_original>
// kernel: tpu_custom_call.1
$region0: #{tpu_custom_call.1}
  #allocation0 [shape = 'u32[]', space=smem, size = 0x4, offset = 0x4, fixed_abs, tag = 'smem constant byte address 0x4 - core index']
  #allocation1 [shape = 'u32[144,128]{1,0:T(1,128)}', space=vmem, size = 0x12000, scoped, tag = 'internal scratch']
  %s0 = inlined_call_operand.hbm [shape: f32[2,8,32], index: 0, kind: input, shape index: {}]
  %s1 = inlined_call_operand.hbm [shape: f32[1,8,32], index: 1, kind: input, shape index: {}]
  %s2 = inlined_call_operand.hbm [shape: f32[2,8,32], index: 2, kind: output, shape index: {}]
  %s3 = sld [smem:[#allocation0]]
  $region49: #{tpu_custom_call.1} parent=0
    _
  %s5 = ssub.s32 1, %s3
  %s6 = scalar_select 0, %s5, %s3
  $region1: #{tpu_custom_call.1} parent=0
    #allocation2 [shape = 'u8[8192]{0}', space=vmem, size = 0x2000, scoped, tag = 'input window, operand 0']
    #allocation3 [shape = 's32[2]{0}', space=sflag, size = 0x8, scoped, tag = 'scoped memory for tpu_custom_call.1']
    #allocation4 [shape = 's32[2]{0}', space=sflag, size = 0x8, scoped, tag = 'scoped memory for tpu_custom_call.1']
    #allocation5 [shape = 'u8[4096]{0}', space=vmem, size = 0x1000, scoped, tag = 'input window, operand 1, single buffered']
    #allocation6 [shape = 's32[1]{0}', space=sflag, size = 0x4, scoped, tag = 'scoped memory for tpu_custom_call.1']
    #allocation7 [shape = 'u8[8192]{0}', space=vmem, size = 0x2000, scoped, tag = 'output window, operand 0']
    %7 = vsyncpa [#allocation3], 0
    %s8 = scalar_lea.sflag [#allocation3], 1
    %9 = vsyncpa %s8, 0
    %10 = vsyncpa [#allocation6], 0
    %11 = vsyncpa [#allocation4], 0
    %s12 = scalar_lea.sflag [#allocation4], 1
    %13 = vsyncpa %s12, 0
    loop: start=0, step=1, limit=4
    $region2: #{tpu_custom_call.1} parent=1 // loop_pre_header
      _
    $region3: #{tpu_custom_call.1} parent=1 // loop_header
      %s15 = sphi 0, %s19
      %p16 = scmp.ge.s32.totalorder %s15, 4
      %s22 = sphi 0, %s34
      %s23 = sphi 0, %s30
      %s24 = sphi 0, %s22
      %s25 = sphi 0, %s23
      %s26 = sphi 0, %s24
      %s27 = sphi 0, %s25
      %s39 = sphi 0, %s41
      %s42 = sphi 0, %s39
      %s43 = sphi 0, %s42
      %s59 = sphi 0, %s43
      %s65 = sphi 0, %s67
      %s68 = sphi 0, %s65
      %s69 = sphi 0, %s68
      %s85 = sphi 0, %s69
      %s93 = sphi 0, %s95
      %s96 = sphi 0, %s93
      %s97 = sphi 0, %s96
      %s113 = sphi 0, %s97
    $region4: #{tpu_custom_call.1} parent=1 // loop_header_branch
      %18 = sbr.rel (%p16) target = $region8
    $region5: #{tpu_custom_call.1} parent=1 // loop_body
      %s20 = ssub.s32 %s15, 1
      %s21 = ssub.s32 %s15, 2
      %s28 = sadd.s32 1, %s23
      %p29 = scmp.ge.s32.totalorder %s28, 2
      %s30 = scalar_select %p29, 0, %s28
      %s31 = sadd.s32 1, %s22
      %s32 = scalar_select %p29, %s31, %s22
      %p33 = scmp.ge.s32.totalorder %s32, 1
      %s34 = scalar_select %p33, 0, %s32
      %s35 = ssub.s32 %s23, %s30
      %s36 = ssub.s32 %s22, %s34
      %s37 = sor.u32 %s35, %s36
      %p38 = scmp.eq.s32.totalorder %s37, 0
      %s40 = sadd.s32 %s39, 1
      %s41 = scalar_select %p38, %s39, %s40
      %p44 = pneg %p38
      %p45 = scmp.eq.s32.totalorder %s15, 1
      %p46 = por %p44, %p45
      %p47 = scmp.ne.s32.totalorder %s39, %s42
      %p48 = scmp.eq.s32.totalorder %s15, 0
      %p49 = por %p47, %p48
      %p50 = scmp.ne.s32.totalorder %s39, %s42
      %p51 = scmp.eq.s32.totalorder %s20, 1
      %p52 = por %p50, %p51
      %p53 = scmp.ne.s32.totalorder %s42, %s43
      %p54 = scmp.eq.s32.totalorder %s20, 0
      %p55 = por %p53, %p54
      %p56 = scmp.ne.s32.totalorder %s42, %s43
      %p57 = scmp.eq.s32.totalorder %s21, 1
      %p58 = por %p56, %p57
      %p60 = scmp.ne.s32.totalorder %s43, %s59
      %p61 = scmp.eq.s32.totalorder %s21, 0
      %p62 = por %p60, %p61
      %s63 = ssub.s32 %s22, %s34
      %p64 = scmp.eq.s32.totalorder %s63, 0
      %s66 = sadd.s32 %s65, 1
      %s67 = scalar_select %p64, %s65, %s66
      %p70 = pneg %p64
      %p71 = scmp.eq.s32.totalorder %s15, 1
      %p72 = por %p70, %p71
      %p73 = scmp.ne.s32.totalorder %s65, %s68
      %p74 = scmp.eq.s32.totalorder %s15, 0
      %p75 = por %p73, %p74
      %p76 = scmp.ne.s32.totalorder %s65, %s68
      %p77 = scmp.eq.s32.totalorder %s20, 1
      %p78 = por %p76, %p77
      %p79 = scmp.ne.s32.totalorder %s68, %s69
      %p80 = scmp.eq.s32.totalorder %s20, 0
      %p81 = por %p79, %p80
      %p82 = scmp.ne.s32.totalorder %s68, %s69
      %p83 = scmp.eq.s32.totalorder %s21, 1
      %p84 = por %p82, %p83
      %p86 = scmp.ne.s32.totalorder %s69, %s85
      %p87 = scmp.eq.s32.totalorder %s21, 0
      %p88 = por %p86, %p87
      %s89 = ssub.s32 %s23, %s30
      %s90 = ssub.s32 %s22, %s34
      %s91 = sor.u32 %s89, %s90
      %p92 = scmp.eq.s32.totalorder %s91, 0
      %s94 = sadd.s32 %s93, 1
      %s95 = scalar_select %p92, %s93, %s94
      %p98 = pneg %p92
      %p99 = scmp.eq.s32.totalorder %s15, 1
      %p100 = por %p98, %p99
      %p101 = scmp.ne.s32.totalorder %s93, %s96
      %p102 = scmp.eq.s32.totalorder %s15, 0
      %p103 = por %p101, %p102
      %p104 = scmp.ne.s32.totalorder %s93, %s96
      %p105 = scmp.eq.s32.totalorder %s20, 1
      %p106 = por %p104, %p105
      %p107 = scmp.ne.s32.totalorder %s96, %s97
      %p108 = scmp.eq.s32.totalorder %s20, 0
      %p109 = por %p107, %p108
      %p110 = scmp.ne.s32.totalorder %s96, %s97
      %p111 = scmp.eq.s32.totalorder %s21, 1
      %p112 = por %p110, %p111
      %p114 = scmp.ne.s32.totalorder %s97, %s113
      %p115 = scmp.eq.s32.totalorder %s21, 0
      %p116 = por %p114, %p115
      %p117 = scmp.le.s32.totalorder 1, %s15
      %p118 = scmp.lt.s32.totalorder %s15, 3
      %p119 = pnand %p117, %p118
      %p120 = pneg %p119
      // Predicated region
      $region9: #{tpu_custom_call.1} parent=5 // pred_check
        _
      $region10: #{tpu_custom_call.1} parent=5 // pred_check_branch
        %122 = sbr.rel (%p119) target = $region12
      $region11: #{tpu_custom_call.1} parent=5 // pred_region
        %s123 = ssub.s32 %s15, 1
        // Predicated region
        $region13: #{tpu_custom_call.1} parent=11 // pred_check
          %p124 = pneg %p81
        $region14: #{tpu_custom_call.1} parent=11 // pred_check_branch
          %126 = sbr.rel (%p124) target = $region16
        $region15: #{tpu_custom_call.1} parent=11 // pred_region
          %s128 = ssub.s32 128, 128
          %129 = vsyncadd [#allocation6], %s128
          %s130 = smul.addr %s24, 128
          %s131 = scalar_lea.hbm %s1, %s130
          %s133 = sshll.u32 [#allocation5], 4
          %s134 = int_to_ptr.vmem [resolvable:$true] %s133
          %136 = dma.hbm_to_vmem [thread:$0]  %s131, 128, %s134, [#allocation6]
        $region16: #{tpu_custom_call.1} parent=11 // pred_fallthru
          _
      $region12: #{tpu_custom_call.1} parent=5 // pred_fallthru
        _
      %p137 = scmp.lt.s32.totalorder %s15, 2
      // Predicated region
      $region17: #{tpu_custom_call.1} parent=5 // pred_check
        %p138 = pneg %p137
      $region18: #{tpu_custom_call.1} parent=5 // pred_check_branch
        %140 = sbr.rel (%p138) target = $region20
      $region19: #{tpu_custom_call.1} parent=5 // pred_region
        // Predicated region
        $region21: #{tpu_custom_call.1} parent=19 // pred_check
          %p141 = pneg %p49
        $region22: #{tpu_custom_call.1} parent=19 // pred_check_branch
          %143 = sbr.rel (%p141) target = $region24
        $region23: #{tpu_custom_call.1} parent=19 // pred_region
          %s144 = sand.u32 %s39, 1
          %s145 = scalar_lea.sflag [#allocation3], %s144
          %s146 = sand.u32 %s39, 1
          %s147 = smul.addr %s146, 8
          %s148 = scalar_lea.vmem [#allocation2], %s147
          %s150 = ssub.s32 128, 128
          %151 = vsyncadd %s145, %s150
          %s152 = sadd.s32 %s22, %s23
          %s153 = smul.addr %s152, 128
          %s154 = scalar_lea.hbm %s0, %s153
          %s156 = sshll.u32 %s148, 4
          %s157 = int_to_ptr.vmem [resolvable:$true] %s156
          %159 = dma.hbm_to_vmem [thread:$0]  %s154, 128, %s157, %s145
        $region24: #{tpu_custom_call.1} parent=19 // pred_fallthru
          _
      $region20: #{tpu_custom_call.1} parent=5 // pred_fallthru
        _
      %p160 = scmp.le.s32.totalorder 1, %s15
      %p161 = scmp.lt.s32.totalorder %s15, 3
      %p162 = pnand %p160, %p161
      %p163 = pneg %p162
      // Predicated region
      $region25: #{tpu_custom_call.1} parent=5 // pred_check
        _
      $region26: #{tpu_custom_call.1} parent=5 // pred_check_branch
        %165 = sbr.rel (%p162) target = $region28
      $region27: #{tpu_custom_call.1} parent=5 // pred_region
        %s166 = ssub.s32 %s15, 1
        %s167 = sand.u32 %s42, 1
        %s168 = scalar_lea.sflag [#allocation3], %s167
        %s169 = sand.u32 %s42, 1
        %s170 = smul.addr %s169, 8
        %s171 = scalar_lea.vmem [#allocation2], %s170
        // Predicated region
        $region29: #{tpu_custom_call.1} parent=27 // pred_check
          %p172 = pneg %p55
        $region30: #{tpu_custom_call.1} parent=27 // pred_check_branch
          %174 = sbr.rel (%p172) target = $region32
        $region31: #{tpu_custom_call.1} parent=27 // pred_region
          %175 = dma.done %s168, 128
        $region32: #{tpu_custom_call.1} parent=27 // pred_fallthru
          _
        // Predicated region
        $region33: #{tpu_custom_call.1} parent=27 // pred_check
          %p176 = pneg %p81
        $region34: #{tpu_custom_call.1} parent=27 // pred_check_branch
          %178 = sbr.rel (%p176) target = $region36
        $region35: #{tpu_custom_call.1} parent=27 // pred_region
          %179 = dma.done [#allocation6], 128
        $region36: #{tpu_custom_call.1} parent=27 // pred_fallthru
          _
        %s180 = sand.u32 %s42, 1
        %s181 = scalar_lea.sflag [#allocation3], %s180
        %s182 = sand.u32 %s42, 1
        %s183 = smul.addr %s182, 8
        %s184 = scalar_lea.vmem [#allocation2], %s183
        %p185 = pneg %p55
        %p186 = pneg %p52
        %p187 = pneg %p81
        %p188 = pneg %p78
        %p189 = pneg %p109
        %p190 = pneg %p106
        %s191 = sand.u32 %s96, 1
        %s192 = scalar_lea.sflag [#allocation4], %s191
        %s193 = sand.u32 %s96, 1
        %s194 = smul.addr %s193, 8
        %s195 = scalar_lea.vmem [#allocation7], %s194
        %v196 = vld [vmem:[%s171] sm:$0xff]
        %v197 = vld [vmem:[#allocation5] sm:$0xff]
        %v198 = vadd.f32 %v196, %v197
        %vm199 = vcmask 261120
        %200 = vst.msk [vmem:[%s195] sm:$0xff] %vm199, %v198
        %s201 = sand.u32 %s96, 1
        %s202 = scalar_lea.sflag [#allocation4], %s201
        %s203 = sand.u32 %s96, 1
        %s204 = smul.addr %s203, 8
        %s205 = scalar_lea.vmem [#allocation7], %s204
        // Predicated region
        $region37: #{tpu_custom_call.1} parent=27 // pred_check
          %p206 = pneg %p106
        $region38: #{tpu_custom_call.1} parent=27 // pred_check_branch
          %208 = sbr.rel (%p206) target = $region40
        $region39: #{tpu_custom_call.1} parent=27 // pred_region
          %s210 = ssub.s32 128, 128
          %211 = vsyncadd %s202, %s210
          %s212 = sadd.s32 %s24, %s25
          %s213 = smul.addr %s212, 128
          %s214 = scalar_lea.hbm %s2, %s213
          %s216 = sshll.u32 %s205, 4
          %s217 = int_to_ptr.vmem [resolvable:$true] %s216
          %219 = dma.vmem_to_hbm [thread:$0]  %s217, 128, %s214, %s202
        $region40: #{tpu_custom_call.1} parent=27 // pred_fallthru
          _
      $region28: #{tpu_custom_call.1} parent=5 // pred_fallthru
        _
      %p220 = scmp.le.s32.totalorder 2, %s15
      // Predicated region
      $region41: #{tpu_custom_call.1} parent=5 // pred_check
        %p221 = pneg %p220
      $region42: #{tpu_custom_call.1} parent=5 // pred_check_branch
        %223 = sbr.rel (%p221) target = $region44
      $region43: #{tpu_custom_call.1} parent=5 // pred_region
        %s224 = ssub.s32 %s15, 2
        // Predicated region
        $region45: #{tpu_custom_call.1} parent=43 // pred_check
          %p225 = pneg %p112
        $region46: #{tpu_custom_call.1} parent=43 // pred_check_branch
          %227 = sbr.rel (%p225) target = $region48
        $region47: #{tpu_custom_call.1} parent=43 // pred_region
          %s228 = sand.u32 %s97, 1
          %s229 = scalar_lea.sflag [#allocation4], %s228
          %s230 = sand.u32 %s97, 1
          %s231 = smul.addr %s230, 8
          %s232 = scalar_lea.vmem [#allocation7], %s231
          %233 = dma.done %s229, 128
        $region48: #{tpu_custom_call.1} parent=43 // pred_fallthru
          _
      $region44: #{tpu_custom_call.1} parent=5 // pred_fallthru
        _
    $region6: #{tpu_custom_call.1} parent=1 // loop_footer
      %s19 = sadd.s32 1, %s15
    $region7: #{tpu_custom_call.1} parent=1 // loop_footer_branch
      %14 = sbr.rel target = $region3
    $region8: #{tpu_custom_call.1} parent=1 // loop_exit
      _
    %234 = vsyncpa [#allocation3], 1
    %s235 = scalar_lea.sflag [#allocation3], 1
    %236 = vsyncpa %s235, 1
    %237 = vsyncpa [#allocation6], 1
    %238 = vsyncpa [#allocation4], 1
    %s239 = scalar_lea.sflag [#allocation4], 1
    %240 = vsyncpa %s239, 1

</llo_original>
